<compile_context>
chip_gen: v5e
topology: v5e:2x2
jax: 0.10.0
libtpu: 0.0.40
codegen_flags: <defaults>
</compile_context>

<pallas_src>
from functools import partial

import jax
import jax.numpy as jnp
import numpy as np
from jax import lax
from jax.experimental import pallas as pl
from jax.experimental.pallas import tpu as pltpu

NUM_FEATURES = 96   # matches self.num_features in the PyTorch module
LANES = 128
SUBLANES = 8


def _gather_dma_kernel(idx_ref, table_ref, out_ref, sems):
    """All-at-once HBM->HBM gather of B table entries.

    idx_ref  : SMEM int32[B]        flat row indices (scalar prefetch)
    table_ref: HBM  f32[T, 8, 128]  packed feature table (memory_space=pl.ANY)
    out_ref  : HBM  f32[B, 8, 128]  output slab          (memory_space=pl.ANY)
    sems     : DMA semaphores, shape (B,)
    """
    B = out_ref.shape[0]

    def _start(b, carry):
        # Data-dependent gather: copy one 4 KiB tile straight HBM->HBM.
        pltpu.make_async_copy(
            table_ref.at[idx_ref[b]], out_ref.at[b], sems.at[b]
        ).start()
        return carry

    lax.fori_loop(0, B, _start, 0, unroll=True)   # issue all B DMAs concurrently

    def _wait(b, carry):
        # Source index is irrelevant for wait (only shape/bytes + semaphore matter).
        pltpu.make_async_copy(table_ref.at[0], out_ref.at[b], sems.at[b]).wait()
        return carry

    lax.fori_loop(0, B, _wait, 0, unroll=True)    # single wait pass


def pack_feature_tables(gen_feats, org_feats):
    """One-time host-side packing: [C,S,P,F] x2 -> [2*C*S, 8, 128] lane/tile-dense.

    Each (P*F)=768-element entry is zero-padded to 1024 so it is exactly one native
    f32 (8,128) tile (unmasked stores, cleanly tiled DMA).
    """
    C, S, P, F = gen_feats.shape
    assert org_feats.shape == (C, S, P, F)
    entry = P * F
    tile = SUBLANES * LANES
    entry_pad = ((entry + tile - 1) // tile) * tile          # 768 -> 1024
    flat = jnp.stack([gen_feats, org_feats]).reshape(2 * C * S, entry)
    flat = jnp.pad(flat, ((0, 0), (0, entry_pad - entry)))
    return flat.reshape(2 * C * S, entry_pad // LANES, LANES)


@partial(jax.jit, static_argnames=("C", "S"))
def spvcnn_lookup_packed(packed_tables, data_type, cls_idx, scn_idx, *, C, S):
    """Hot path: batched lookup returning the lane-dense (B, 8, 128) slab.

    packed_tables: [2*C*S, 8, 128] from pack_feature_tables.
    data_type/cls_idx/scn_idx: int32 arrays of length B (data_type: 0='gen', 1='real').
    """
    _, rows_pad, lanes = packed_tables.shape

    # Bounds-safe clamp. NOTE: the torch dict lookup would raise on a bad key; here
    # out-of-range indices are clamped to a valid entry instead of faulting the DMA.
    data_type = jnp.clip(jnp.asarray(data_type, jnp.int32).reshape(-1), 0, 1)
    cls_i = jnp.clip(jnp.asarray(cls_idx, jnp.int32).reshape(-1), 0, C - 1)
    scn_i = jnp.clip(jnp.asarray(scn_idx, jnp.int32).reshape(-1), 0, S - 1)
    flat_idx = (data_type * C + cls_i) * S + scn_i           # int32[B]
    B = flat_idx.shape[0]

    grid_spec = pltpu.PrefetchScalarGridSpec(
        num_scalar_prefetch=1,                               # flat_idx -> SMEM
        grid=(1,),                                           # single invocation
        in_specs=[pl.BlockSpec(memory_space=pl.ANY)],        # raw HBM table ref
        out_specs=pl.BlockSpec(memory_space=pl.ANY),         # raw HBM output ref
        scratch_shapes=[pltpu.SemaphoreType.DMA((B,))],      # one sem per lookup
    )

    bytes_accessed = 2 * B * rows_pad * lanes * packed_tables.dtype.itemsize

    return pl.pallas_call(
        _gather_dma_kernel,
        out_shape=jax.ShapeDtypeStruct((B, rows_pad, lanes), packed_tables.dtype),
        grid_spec=grid_spec,
        compiler_params=pltpu.CompilerParams(dimension_semantics=("arbitrary",)),
        cost_estimate=pl.CostEstimate(
            flops=0, transcendentals=0, bytes_accessed=bytes_accessed),
    )(flat_idx, packed_tables)


def unpack_features(packed_out, P, F):
    """Final-consumer de-pad + reshape: (B, rows_pad, 128) -> (B, P, F)."""
    B = packed_out.shape[0]
    return packed_out.reshape(B, -1)[:, : P * F].reshape(B, P, F)


def spvcnn_forward(packed_tables, data_type, cls_idx, scn_idx, *, C, S, P, F):
    """Full torch-equivalent forward: returns (B, P, F); B=1 == expand_dims(feat, 0).

    Latency-sensitive callers should use spvcnn_lookup_packed() and keep the flattened
    (B, 8, 128) layout downstream to avoid the relayout reshape.
    """
    packed_out = spvcnn_lookup_packed(
        packed_tables, data_type, cls_idx, scn_idx, C=C, S=S)
    return unpack_features(packed_out, P, F)


if __name__ == "__main__":
    key = jax.random.PRNGKey(0)
    num_cls, num_scn, P, F = 3, 4, 8, NUM_FEATURES

    k_gen, k_org = jax.random.split(key)
    # Deterministic synthetic stand-ins for the .npz feature dictionaries.
    gen_feats = jax.random.normal(k_gen, (num_cls, num_scn, P, F), dtype=jnp.float32)
    org_feats = jax.random.normal(k_org, (num_cls, num_scn, P, F), dtype=jnp.float32)

    packed = pack_feature_tables(gen_feats, org_feats)
    dims = dict(C=num_cls, S=num_scn, P=P, F=F)

    # forward((scn_name, 'gen'))  ->  gen_feats[cls_id][scn_id][None]
    out_gen = spvcnn_forward(packed, jnp.array([0], jnp.int32),
                             jnp.array([1], jnp.int32), jnp.array([2], jnp.int32), **dims)
    # forward((scn_name, 'real')) ->  org_feats[cls_id][scn_id][None]
    out_real = spvcnn_forward(packed, jnp.array([1], jnp.int32),
                              jnp.array([2], jnp.int32), jnp.array([3], jnp.int32), **dims)

    # Batched lookups: all gather DMAs issued concurrently in one kernel invocation.
    dts = jnp.array([0, 1, 0, 1, 1, 0], jnp.int32)
    cls = jnp.array([0, 2, 1, 0, 2, 2], jnp.int32)
    scn = jnp.array([3, 1, 0, 2, 3, 1], jnp.int32)
    out_batch = spvcnn_forward(packed, dts, cls, scn, **dims)

    jax.block_until_ready((out_gen, out_real, out_batch))

    assert out_gen.shape == (1, P, F) and out_real.shape == (1, P, F)
    assert out_batch.shape == (dts.shape[0], P, F)

    np.testing.assert_allclose(np.asarray(out_gen[0]), np.asarray(gen_feats[1, 2]),
                               rtol=0, atol=0)
    np.testing.assert_allclose(np.asarray(out_real[0]), np.asarray(org_feats[2, 3]),
                               rtol=0, atol=0)
    gen_np, org_np = np.asarray(gen_feats), np.asarray(org_feats)
    for b in range(dts.shape[0]):
        ref = (org_np if int(dts[b]) == 1 else gen_np)[int(cls[b]), int(scn[b])]
        np.testing.assert_allclose(np.asarray(out_batch[b]), ref, rtol=0, atol=0)

    print("KERNEL_OK")
</pallas_src>

<mosaic_0001>
module attributes {stable_mosaic.version = 11 : i64} {
  func.func @_gather_dma_kernel(%arg0: i32, %arg1: memref<1xi32, #tpu.memory_space<smem>>, %arg2: memref<24x8x128xf32, #tpu.memory_space<any>>, %arg3: memref<1x8x128xf32, #tpu.memory_space<any>>, %arg4: memref<1x!tpu.dma_semaphore, #tpu.memory_space<semaphore_mem>>) attributes {dimension_semantics = [#tpu.dimension_semantics<arbitrary>], iteration_bounds = array<i64: 1>, scalar_prefetch = 1 : i64, scratch_operands = 1 : i64, tpu.core_type = #tpu.core_type<tc>, window_params = [{}, {}]} {
    %c0_i32 = arith.constant 0 : i32
    %0 = arith.index_cast %c0_i32 : i32 to index
    %1 = memref.load %arg1[%0] : memref<1xi32, #tpu.memory_space<smem>>
    %c0_i32_0 = arith.constant 0 : i32
    %c0_i32_1 = arith.constant 0 : i32
    %2 = tpu.memref_slice %arg2[%1, %c0_i32_0, %c0_i32_1] : memref<24x8x128xf32, #tpu.memory_space<any>> -> memref<1x8x128xf32, #tpu.memory_space<any>>
    %3 = tpu.memref_squeeze %2 : memref<1x8x128xf32, #tpu.memory_space<any>> -> memref<8x128xf32, #tpu.memory_space<any>>
    %c0_i32_2 = arith.constant 0 : i32
    %c0_i32_3 = arith.constant 0 : i32
    %4 = tpu.memref_slice %arg3[%c0_i32, %c0_i32_2, %c0_i32_3] : memref<1x8x128xf32, #tpu.memory_space<any>> -> memref<1x8x128xf32, #tpu.memory_space<any>>
    %5 = tpu.memref_squeeze %4 : memref<1x8x128xf32, #tpu.memory_space<any>> -> memref<8x128xf32, #tpu.memory_space<any>>
    %6 = tpu.memref_slice %arg4[%c0_i32] : memref<1x!tpu.dma_semaphore, #tpu.memory_space<semaphore_mem>> -> memref<1x!tpu.dma_semaphore, #tpu.memory_space<semaphore_mem>>
    %7 = tpu.memref_squeeze %6 : memref<1x!tpu.dma_semaphore, #tpu.memory_space<semaphore_mem>> -> memref<!tpu.dma_semaphore, #tpu.memory_space<semaphore_mem>>
    tpu.enqueue_dma source(%3 : memref<8x128xf32, #tpu.memory_space<any>>) target(%5 : memref<8x128xf32, #tpu.memory_space<any>>) target_semaphore(%7 : memref<!tpu.dma_semaphore, #tpu.memory_space<semaphore_mem>>)
    %c1_i32 = arith.constant 1 : i32
    %c0_i32_4 = arith.constant 0 : i32
    %c0_i32_5 = arith.constant 0 : i32
    %c0_i32_6 = arith.constant 0 : i32
    %c0_i32_7 = arith.constant 0 : i32
    %8 = tpu.memref_slice %arg2[%c0_i32_5, %c0_i32_6, %c0_i32_7] : memref<24x8x128xf32, #tpu.memory_space<any>> -> memref<1x8x128xf32, #tpu.memory_space<any>>
    %9 = tpu.memref_squeeze %8 : memref<1x8x128xf32, #tpu.memory_space<any>> -> memref<8x128xf32, #tpu.memory_space<any>>
    %c0_i32_8 = arith.constant 0 : i32
    %c0_i32_9 = arith.constant 0 : i32
    %10 = tpu.memref_slice %arg3[%c0_i32_4, %c0_i32_8, %c0_i32_9] : memref<1x8x128xf32, #tpu.memory_space<any>> -> memref<1x8x128xf32, #tpu.memory_space<any>>
    %11 = tpu.memref_squeeze %10 : memref<1x8x128xf32, #tpu.memory_space<any>> -> memref<8x128xf32, #tpu.memory_space<any>>
    %12 = tpu.memref_slice %arg4[%c0_i32_4] : memref<1x!tpu.dma_semaphore, #tpu.memory_space<semaphore_mem>> -> memref<1x!tpu.dma_semaphore, #tpu.memory_space<semaphore_mem>>
    %13 = tpu.memref_squeeze %12 : memref<1x!tpu.dma_semaphore, #tpu.memory_space<semaphore_mem>> -> memref<!tpu.dma_semaphore, #tpu.memory_space<semaphore_mem>>
    tpu.wait_dma2 semaphore(%13 : memref<!tpu.dma_semaphore, #tpu.memory_space<semaphore_mem>>) src(%9 : memref<8x128xf32, #tpu.memory_space<any>>) dst(%11 : memref<8x128xf32, #tpu.memory_space<any>>)
    %c1_i32_10 = arith.constant 1 : i32
    return
  }
}

</mosaic_0001>

<llo_original>
// kernel: spvcnn_lookup_packed.1
$region0: #{spvcnn_lookup_packed.1}
  #allocation0 [shape = 'u32[]', space=smem, size = 0x4, offset = 0x4, fixed_abs, tag = 'smem constant byte address 0x4 - core index']
  #allocation1 [shape = 'u32[72,128]{1,0:T(1,128)}', space=vmem, size = 0x9000, scoped, tag = 'internal scratch']
  #allocation2 [shape = 's32[1]{0}', space=sflag, size = 0x4, scoped, tag = 'scratch operand']
  #allocation3 [shape = 's32[1]{0}', space=sflag, size = 0x4, scoped, tag = 'scoped memory for spvcnn_lookup_packed.1']
  #allocation4 [shape = 's32[1]{0:T(128)S(6)}', space=smem, size = 0x200, scoped, tag = 'prefetched SMEM operand 0']
  #allocation5 [shape = 's32[]', space=sflag, size = 0x4, offset = 0, fixed_abs, tag = 'sflag constant byte address 0x0 - dummy sync flag']
  #allocation6 [shape = 'u32[0]{0}', space=smem, size = 0, offset = 0, fixed_abs, tag = 'smem constant byte address 0x0 - null']
  %s0 = inlined_call_operand.<no memory space> [shape: s32[1], index: 0, kind: input, shape index: {}]
  %s1 = inlined_call_operand.hbm [shape: f32[24,8,128], index: 1, kind: input, shape index: {}]
  %s2 = inlined_call_operand.hbm [shape: f32[1,8,128], index: 2, kind: output, shape index: {}]
  %s3 = sld [smem:[#allocation0]]
  $region2: #{spvcnn_lookup_packed.1} parent=0
    _
  %s5 = ssub.s32 1, %s3
  %s6 = scalar_select 0, %s5, %s3
  %7 = sst [smem:[#allocation4]] %s0
  %s8 = sld [smem:[#allocation4]]
  %s9 = smul.u32 %s8, 8
  %s10 = scalar_lea.hbm %s1, %s9
  %s12 = sshll.u32 1, 14
  %s13 = sxor.u32 4294967295, %s12
  %s15 = sshll.u32 %s10, 4
  %s16 = int_to_ptr.hbm [resolvable:$true] %s15
  %s17 = sshll.u32 %s2, 4
  %s18 = int_to_ptr.hbm [resolvable:$true] %s17
  %21 = dma.general %s16, 128, %s18, [#allocation2], [#allocation5], [#allocation6], 0, 0
  %s22 = smul.u32 8, 1
  %s23 = sshll.u32 %s22, 4
  %24 = dma.done [#allocation2], %s23
  %25 = vsyncmov [#allocation2]
  %s26 = vpop.sfrf %25
  %p27 = scmp.eq.s32.totalorder %s26, 0
  %p28 = pneg %p27
  %30 = shalt.err (%p28)

</llo_original>
